<compile_context>
chip_gen: v7x
topology: tpu7x:2x2x1
jax: 0.10.0
libtpu: 0.0.40
codegen_flags: <defaults>
</compile_context>

<pallas_src>
import jax
import jax.numpy as jnp
import numpy as np
from jax.experimental import pallas as pl
from jax.experimental.pallas import tpu as pltpu

N_NODES = 64       # nodes in the graph
IN_FEATS = 16
N_HIDDEN = 32
N_CLASSES = 8
N_LAYERS = 2       # module builds: in->hidden, (n_layers-1) x hidden->hidden, hidden->classes
N_GRAPHCONV = N_LAYERS + 1


def make_gcn_kernel(n_graphconv):
    def gcn_kernel(a_ref, x_ref, *refs):
        # refs = (w0, b0, w1, b1, ..., w_last, b_last, out)
        out_ref = refs[-1]
        a = a_ref[...]                       # (N, N) normalized adjacency
        h = x_ref[...]                       # (N, F_in)
        for i in range(n_graphconv):
            w = refs[2 * i][...]             # (F_in_i, F_out_i)
            b = refs[2 * i + 1][...]         # (1, F_out_i)
            # GraphConv: h' = A_hat @ (h @ W) + b   -> two MXU matmuls
            h = jnp.dot(h, w, preferred_element_type=jnp.float32)
            h = jnp.dot(a, h, preferred_element_type=jnp.float32) + b
            if i < n_graphconv - 1:          # hidden-layer activation (ReLU)
                h = jnp.maximum(h, 0.0)
            # dropout between layers: identity in inference mode
        out_ref[...] = jnp.tanh(h)
    return gcn_kernel


def gcn_forward(a_hat, x, params):
    flat = []
    for w, b in params:
        flat += [w, b.reshape(1, -1)]
    inputs = (a_hat, x, *flat)
    vmem = pl.BlockSpec(memory_space=pltpu.MemorySpace.VMEM)
    return pl.pallas_call(
        make_gcn_kernel(len(params)),
        out_shape=jax.ShapeDtypeStruct((x.shape[0], params[-1][0].shape[1]),
                                       jnp.float32),
        in_specs=[vmem] * len(inputs),
        out_specs=vmem,
    )(*inputs)


# ---------------- deterministic graph/params + pure-JAX reference -----------
def init_graph_and_params(key):
    keys = jax.random.split(key, 1 + 2 * N_GRAPHCONV)
    kg, kw = keys[0], keys[1:]

    # random undirected graph with self-loops, symmetrically normalized
    a = (jax.random.uniform(kg, (N_NODES, N_NODES)) < 0.1).astype(jnp.float32)
    a = jnp.maximum(a, a.T)                       # symmetrize
    a = jnp.maximum(a, jnp.eye(N_NODES, dtype=jnp.float32))   # self-loops
    d_inv_sqrt = 1.0 / jnp.sqrt(jnp.sum(a, axis=1))
    a_hat = a * d_inv_sqrt[:, None] * d_inv_sqrt[None, :]

    dims = [IN_FEATS] + [N_HIDDEN] * N_LAYERS + [N_CLASSES]
    params = []
    for i in range(N_GRAPHCONV):
        fan_in, fan_out = dims[i], dims[i + 1]
        bound = 1.0 / np.sqrt(fan_in)
        w = jax.random.uniform(kw[2 * i], (fan_in, fan_out), jnp.float32,
                               -bound, bound)
        b = jax.random.uniform(kw[2 * i + 1], (fan_out,), jnp.float32,
                               -bound, bound)
        params.append((w, b))
    return a_hat, params


def gcn_reference(a_hat, x, params):
    h = x
    for i, (w, b) in enumerate(params):
        # (dropout is identity in eval mode)
        h = a_hat @ (h @ w) + b[None, :]
        if i < len(params) - 1:
            h = jax.nn.relu(h)
    return jnp.tanh(h)


if __name__ == "__main__":
    key = jax.random.PRNGKey(0)
    kx, kg = jax.random.split(key)
    a_hat, params = init_graph_and_params(kg)
    x = jax.random.normal(kx, (N_NODES, IN_FEATS), jnp.float32)

    out = jax.block_until_ready(gcn_forward(a_hat, x, params))
    ref = jax.block_until_ready(gcn_reference(a_hat, x, params))

    assert out.shape == (N_NODES, N_CLASSES)
    diff = np.abs(np.asarray(out) - np.asarray(ref)).max()
    if not np.allclose(np.asarray(out), np.asarray(ref), atol=2e-2, rtol=2e-2):
        raise AssertionError(f"kernel vs reference mismatch, max|diff|={diff}")
    print("KERNEL_OK")
</pallas_src>

<mosaic_0001>
module attributes {stable_mosaic.version = 11 : i64} {
  func.func @gcn_kernel(%arg0: memref<64x64xf32, #tpu.memory_space<vmem>>, %arg1: memref<64x16xf32, #tpu.memory_space<vmem>>, %arg2: memref<16x32xf32, #tpu.memory_space<vmem>>, %arg3: memref<1x32xf32, #tpu.memory_space<vmem>>, %arg4: memref<32x32xf32, #tpu.memory_space<vmem>>, %arg5: memref<1x32xf32, #tpu.memory_space<vmem>>, %arg6: memref<32x8xf32, #tpu.memory_space<vmem>>, %arg7: memref<1x8xf32, #tpu.memory_space<vmem>>, %arg8: memref<64x8xf32, #tpu.memory_space<vmem>>) attributes {dimension_semantics = [], scalar_prefetch = 0 : i64, scratch_operands = 0 : i64, tpu.core_type = #tpu.core_type<tc>} {
    %c0 = arith.constant 0 : index
    %c0_0 = arith.constant 0 : index
    %0 = vector.load %arg0[%c0, %c0_0] : memref<64x64xf32, #tpu.memory_space<vmem>>, vector<64x64xf32>
    %c0_1 = arith.constant 0 : index
    %c0_2 = arith.constant 0 : index
    %1 = vector.load %arg1[%c0_1, %c0_2] : memref<64x16xf32, #tpu.memory_space<vmem>>, vector<64x16xf32>
    %c0_3 = arith.constant 0 : index
    %c0_4 = arith.constant 0 : index
    %2 = vector.load %arg2[%c0_3, %c0_4] : memref<16x32xf32, #tpu.memory_space<vmem>>, vector<16x32xf32>
    %c0_5 = arith.constant 0 : index
    %c0_6 = arith.constant 0 : index
    %3 = vector.load %arg3[%c0_5, %c0_6] : memref<1x32xf32, #tpu.memory_space<vmem>>, vector<1x32xf32>
    %cst = arith.constant dense<0.000000e+00> : vector<64x32xf32>
    %4 = tpu.matmul %1, %2, %cst {dimension_numbers = #tpu.dot_dimension_numbers<[1], [0], [0], [1], [0, 0, 1, 1], [], []>} : vector<64x16xf32>, vector<16x32xf32>, vector<64x32xf32> -> vector<64x32xf32>
    %cst_7 = arith.constant dense<0.000000e+00> : vector<64x32xf32>
    %5 = tpu.matmul %0, %4, %cst_7 {dimension_numbers = #tpu.dot_dimension_numbers<[1], [0], [0], [1], [0, 0, 1, 1], [], []>} : vector<64x64xf32>, vector<64x32xf32>, vector<64x32xf32> -> vector<64x32xf32>
    %6 = vector.broadcast %3 : vector<1x32xf32> to vector<64x32xf32>
    %7 = arith.addf %5, %6 : vector<64x32xf32>
    %cst_8 = arith.constant 0.000000e+00 : f32
    %8 = vector.broadcast %cst_8 : f32 to vector<64x32xf32>
    %9 = arith.maximumf %7, %8 : vector<64x32xf32>
    %c0_9 = arith.constant 0 : index
    %c0_10 = arith.constant 0 : index
    %10 = vector.load %arg4[%c0_9, %c0_10] : memref<32x32xf32, #tpu.memory_space<vmem>>, vector<32x32xf32>
    %c0_11 = arith.constant 0 : index
    %c0_12 = arith.constant 0 : index
    %11 = vector.load %arg5[%c0_11, %c0_12] : memref<1x32xf32, #tpu.memory_space<vmem>>, vector<1x32xf32>
    %cst_13 = arith.constant dense<0.000000e+00> : vector<64x32xf32>
    %12 = tpu.matmul %9, %10, %cst_13 {dimension_numbers = #tpu.dot_dimension_numbers<[1], [0], [0], [1], [0, 0, 1, 1], [], []>} : vector<64x32xf32>, vector<32x32xf32>, vector<64x32xf32> -> vector<64x32xf32>
    %cst_14 = arith.constant dense<0.000000e+00> : vector<64x32xf32>
    %13 = tpu.matmul %0, %12, %cst_14 {dimension_numbers = #tpu.dot_dimension_numbers<[1], [0], [0], [1], [0, 0, 1, 1], [], []>} : vector<64x64xf32>, vector<64x32xf32>, vector<64x32xf32> -> vector<64x32xf32>
    %14 = vector.broadcast %11 : vector<1x32xf32> to vector<64x32xf32>
    %15 = arith.addf %13, %14 : vector<64x32xf32>
    %cst_15 = arith.constant 0.000000e+00 : f32
    %16 = vector.broadcast %cst_15 : f32 to vector<64x32xf32>
    %17 = arith.maximumf %15, %16 : vector<64x32xf32>
    %c0_16 = arith.constant 0 : index
    %c0_17 = arith.constant 0 : index
    %18 = vector.load %arg6[%c0_16, %c0_17] : memref<32x8xf32, #tpu.memory_space<vmem>>, vector<32x8xf32>
    %c0_18 = arith.constant 0 : index
    %c0_19 = arith.constant 0 : index
    %19 = vector.load %arg7[%c0_18, %c0_19] : memref<1x8xf32, #tpu.memory_space<vmem>>, vector<1x8xf32>
    %cst_20 = arith.constant dense<0.000000e+00> : vector<64x8xf32>
    %20 = tpu.matmul %17, %18, %cst_20 {dimension_numbers = #tpu.dot_dimension_numbers<[1], [0], [0], [1], [0, 0, 1, 1], [], []>} : vector<64x32xf32>, vector<32x8xf32>, vector<64x8xf32> -> vector<64x8xf32>
    %cst_21 = arith.constant dense<0.000000e+00> : vector<64x8xf32>
    %21 = tpu.matmul %0, %20, %cst_21 {dimension_numbers = #tpu.dot_dimension_numbers<[1], [0], [0], [1], [0, 0, 1, 1], [], []>} : vector<64x64xf32>, vector<64x8xf32>, vector<64x8xf32> -> vector<64x8xf32>
    %22 = vector.broadcast %19 : vector<1x8xf32> to vector<64x8xf32>
    %23 = arith.addf %21, %22 : vector<64x8xf32>
    %24 = math.tanh %23 : vector<64x8xf32>
    %c0_22 = arith.constant 0 : index
    %c0_23 = arith.constant 0 : index
    %25 = vector.load %arg8[%c0_22, %c0_23] : memref<64x8xf32, #tpu.memory_space<vmem>>, vector<64x8xf32>
    tpu.vector_store %arg8[%c0_22, %c0_23], %24 {strides = array<i32>} : memref<64x8xf32, #tpu.memory_space<vmem>>, vector<64x8xf32>,
    return
  }
}

</mosaic_0001>

<llo_original>
// kernel: tpu_custom_call.1
$region0: #{tpu_custom_call.1}
  #allocation0 [shape = 'u32[]', space=smem, size = 0x4, offset = 0x4, fixed_abs, tag = 'smem constant byte address 0x4 - core index']
  #allocation1 [shape = 'u32[144,128]{1,0:T(1,128)}', space=vmem, size = 0x12000, scoped, tag = 'internal scratch']
  %s0 = inlined_call_operand.vmem [shape: f32[64,64], index: 0, kind: input, shape index: {}]
  %s1 = inlined_call_operand.vmem [shape: f32[64,16], index: 1, kind: input, shape index: {}]
  %s2 = inlined_call_operand.hbm [shape: f32[16,32], index: 2, kind: input, shape index: {}]
  %s3 = inlined_call_operand.vmem [shape: f32[1,32], index: 3, kind: input, shape index: {}]
  %s4 = inlined_call_operand.vmem [shape: f32[32,32], index: 4, kind: input, shape index: {}]
  %s5 = inlined_call_operand.vmem [shape: f32[1,32], index: 5, kind: input, shape index: {}]
  %s6 = inlined_call_operand.vmem [shape: f32[32,8], index: 6, kind: input, shape index: {}]
  %s7 = inlined_call_operand.vmem [shape: f32[1,8], index: 7, kind: input, shape index: {}]
  %s8 = inlined_call_operand.vmem [shape: f32[64,8], index: 8, kind: output, shape index: {}]
  %s9 = sld [smem:[#allocation0]]
  $region46: #{tpu_custom_call.1} parent=0
    _
  %s11 = ssub.s32 1, %s9
  %s12 = scalar_select 0, %s11, %s9
  $region1: #{tpu_custom_call.1} parent=0
    #allocation2 [shape = 'u8[8192]{0}', space=vmem, size = 0x2000, scoped, tag = 'input window, operand 2, single buffered']
    #allocation3 [shape = 's32[1]{0}', space=sflag, size = 0x4, scoped, tag = 'scoped memory for tpu_custom_call.1']
    %13 = vsyncpa [#allocation3], 0
    // Predicated region
    $region2: #{tpu_custom_call.1} parent=1 // pred_check
      _
    $region3: #{tpu_custom_call.1} parent=1 // pred_check_branch
      %15 = sbr.rel (0) target = $region5
    $region4: #{tpu_custom_call.1} parent=1 // pred_region
      _
    $region5: #{tpu_custom_call.1} parent=1 // pred_fallthru
      _
    // Predicated region
    $region6: #{tpu_custom_call.1} parent=1 // pred_check
      _
    $region7: #{tpu_custom_call.1} parent=1 // pred_check_branch
      %17 = sbr.rel (0) target = $region9
    $region8: #{tpu_custom_call.1} parent=1 // pred_region
      _
    $region9: #{tpu_custom_call.1} parent=1 // pred_fallthru
      _
    // Predicated region
    $region10: #{tpu_custom_call.1} parent=1 // pred_check
      _
    $region11: #{tpu_custom_call.1} parent=1 // pred_check_branch
      %19 = sbr.rel (0) target = $region13
    $region12: #{tpu_custom_call.1} parent=1 // pred_region
      %s21 = ssub.s32 256, 256
      %22 = vsyncadd [#allocation3], %s21
      %s23 = sshll.u32 [#allocation2], 4
      %s24 = int_to_ptr.vmem [resolvable:$true] %s23
      %29 = dma.hbm_to_vmem [thread:$0]  %s2, 256, %s24, [#allocation3], 128, 128, 8
    $region13: #{tpu_custom_call.1} parent=1 // pred_fallthru
      _
    // Predicated region
    $region14: #{tpu_custom_call.1} parent=1 // pred_check
      _
    $region15: #{tpu_custom_call.1} parent=1 // pred_check_branch
      %31 = sbr.rel (0) target = $region17
    $region16: #{tpu_custom_call.1} parent=1 // pred_region
      _
    $region17: #{tpu_custom_call.1} parent=1 // pred_fallthru
      _
    // Predicated region
    $region18: #{tpu_custom_call.1} parent=1 // pred_check
      _
    $region19: #{tpu_custom_call.1} parent=1 // pred_check_branch
      %33 = sbr.rel (0) target = $region21
    $region20: #{tpu_custom_call.1} parent=1 // pred_region
      _
    $region21: #{tpu_custom_call.1} parent=1 // pred_fallthru
      _
    // Predicated region
    $region22: #{tpu_custom_call.1} parent=1 // pred_check
      _
    $region23: #{tpu_custom_call.1} parent=1 // pred_check_branch
      %35 = sbr.rel (0) target = $region25
    $region24: #{tpu_custom_call.1} parent=1 // pred_region
      _
    $region25: #{tpu_custom_call.1} parent=1 // pred_fallthru
      _
    // Predicated region
    $region26: #{tpu_custom_call.1} parent=1 // pred_check
      _
    $region27: #{tpu_custom_call.1} parent=1 // pred_check_branch
      %37 = sbr.rel (0) target = $region29
    $region28: #{tpu_custom_call.1} parent=1 // pred_region
      _
    $region29: #{tpu_custom_call.1} parent=1 // pred_fallthru
      _
    // Predicated region
    $region30: #{tpu_custom_call.1} parent=1 // pred_check
      _
    $region31: #{tpu_custom_call.1} parent=1 // pred_check_branch
      %39 = sbr.rel (0) target = $region33
    $region32: #{tpu_custom_call.1} parent=1 // pred_region
      _
    $region33: #{tpu_custom_call.1} parent=1 // pred_fallthru
      _
    // Predicated region
    $region34: #{tpu_custom_call.1} parent=1 // pred_check
      _
    $region35: #{tpu_custom_call.1} parent=1 // pred_check_branch
      %41 = sbr.rel (0) target = $region37
    $region36: #{tpu_custom_call.1} parent=1 // pred_region
      %42 = dma.done [#allocation3], 256
    $region37: #{tpu_custom_call.1} parent=1 // pred_fallthru
      _
    %v43 = vld [vmem:[%s0] sm:$0xff]
    %v44 = vld [vmem:[%s0 + $0x8] sm:$0xff]
    %v45 = vld [vmem:[%s0 + $0x10] sm:$0xff]
    %v46 = vld [vmem:[%s0 + $0x18] sm:$0xff]
    %v47 = vld [vmem:[%s0 + $0x20] sm:$0xff]
    %v48 = vld [vmem:[%s0 + $0x28] sm:$0xff]
    %v49 = vld [vmem:[%s0 + $0x30] sm:$0xff]
    %v50 = vld [vmem:[%s0 + $0x38] sm:$0xff]
    %v51 = vld [vmem:[%s1] sm:$0xff]
    %v52 = vld [vmem:[%s1 + $0x8] sm:$0xff]
    %v53 = vld [vmem:[%s1 + $0x10] sm:$0xff]
    %v54 = vld [vmem:[%s1 + $0x18] sm:$0xff]
    %v55 = vld [vmem:[%s1 + $0x20] sm:$0xff]
    %v56 = vld [vmem:[%s1 + $0x28] sm:$0xff]
    %v57 = vld [vmem:[%s1 + $0x30] sm:$0xff]
    %v58 = vld [vmem:[%s1 + $0x38] sm:$0xff]
    %v59 = vld [vmem:[#allocation2] sm:$0xff]
    %v60 = vld [vmem:[#allocation2 + $0x8] sm:$0xff]
    %v61 = vld [vmem:[%s3] sm:$0x1]
    %vm62 = vcmask 130048
    %v64 = vsel %vm62, %v51, 0
    %v67 = vsel %vm62, %v52, 0
    %v70 = vsel %vm62, %v53, 0
    %v73 = vsel %vm62, %v54, 0
    %v76 = vsel %vm62, %v55, 0
    %v79 = vsel %vm62, %v56, 0
    %v82 = vsel %vm62, %v57, 0
    %v85 = vsel %vm62, %v58, 0
    %87 = vmatprep.subr.mxu0 0.0
    %88 = vmatpush1.msra.mxu0 %v59
    %89 = vmatprep.subr.mxu0 0.0
    %90 = vmatpush1.msra.mxu0 %v60
    %91 = vmatprep.subr.mxu0 0.0
    %92 = vmatpush1.msra.mxu0 0.0
    %93 = vmatprep.subr.mxu0 0.0
    %94 = vmatpush1.msra.mxu0 0.0
    %95 = vmatprep.subr.mxu0 0.0
    %96 = vmatpush1.msra.mxu0 0.0
    %97 = vmatprep.subr.mxu0 0.0
    %98 = vmatpush1.msra.mxu0 0.0
    %99 = vmatprep.subr.mxu0 0.0
    %100 = vmatpush1.msra.mxu0 0.0
    %101 = vmatprep.subr.mxu0 0.0
    %102 = vmatpush1.msra.mxu0 0.0
    %103 = vmatprep.subr.mxu0 0.0
    %104 = vmatpush1.msra.mxu0 0.0
    %105 = vmatprep.subr.mxu0 0.0
    %106 = vmatpush1.msra.mxu0 0.0
    %107 = vmatprep.subr.mxu0 0.0
    %108 = vmatpush1.msra.mxu0 0.0
    %109 = vmatprep.subr.mxu0 0.0
    %110 = vmatpush1.msra.mxu0 0.0
    %111 = vmatprep.subr.mxu0 0.0
    %112 = vmatpush1.msra.mxu0 0.0
    %113 = vmatprep.subr.mxu0 0.0
    %114 = vmatpush1.msra.mxu0 0.0
    %115 = vmatprep.subr.mxu0 0.0
    %116 = vmatpush1.msra.mxu0 0.0
    %117 = vmatprep.subr.mxu0 0.0
    %118 = vmatpush1.msra.mxu0 0.0
    %119 = vmatprep.subr.mxu0 0.0
    %120 = vmatpush1.msra.mxu0 0.0
    %121 = vmatprep.subr.mxu0 0.0
    %122 = vmatpush1.msra.mxu0 0.0
    %123 = vmatprep.subr.mxu0 0.0
    %124 = vmatpush1.msra.mxu0 0.0
    %125 = vmatprep.subr.mxu0 0.0
    %126 = vmatpush1.msra.mxu0 0.0
    %127 = vmatprep.subr.mxu0 0.0
    %128 = vmatpush1.msra.mxu0 0.0
    %129 = vmatprep.subr.mxu0 0.0
    %130 = vmatpush1.msra.mxu0 0.0
    %131 = vmatprep.subr.mxu0 0.0
    %132 = vmatpush1.msra.mxu0 0.0
    %133 = vmatprep.subr.mxu0 0.0
    %134 = vmatpush1.msra.mxu0 0.0
    %135 = vmatprep.subr.mxu0 0.0
    %136 = vmatpush1.msra.mxu0 0.0
    %137 = vmatprep.subr.mxu0 0.0
    %138 = vmatpush1.msra.mxu0 0.0
    %139 = vmatprep.subr.mxu0 0.0
    %140 = vmatpush1.msra.mxu0 0.0
    %141 = vmatprep.subr.mxu0 0.0
    %142 = vmatpush1.msra.mxu0 0.0
    %143 = vmatprep.subr.mxu0 0.0
    %144 = vmatpush1.msra.mxu0 0.0
    %145 = vmatprep.subr.mxu0 0.0
    %146 = vmatpush1.msra.mxu0 0.0
    %147 = vmatprep.subr.mxu0 0.0
    %148 = vmatpush1.msra.mxu0 0.0
    %149 = vmatprep.subr.mxu0 0.0
    %150 = vmatpush1.msra.mxu0 0.0
    %151 = vmatprep.mubr.f32.mxu0 0.0
    %152 = vmatmul.mubr.f32.gmra.mrb[0].mxu0 %v64
    %v153 = vpop.f32.mrb[0].mxu0
    %v154 = vadd.f32 0.0, %v153
    %v155 = vpop.f32.mrb[0].mxu0
    %156 = vmatprep.mubr.f32.mxu0 0.0
    %157 = vmatmul.mubr.f32.gmra.mrb[0].mxu0 %v67
    %v158 = vpop.f32.mrb[0].mxu0
    %v159 = vadd.f32 0.0, %v158
    %v160 = vpop.f32.mrb[0].mxu0
    %161 = vmatprep.mubr.f32.mxu0 0.0
    %162 = vmatmul.mubr.f32.gmra.mrb[0].mxu0 %v70
    %v163 = vpop.f32.mrb[0].mxu0
    %v164 = vadd.f32 0.0, %v163
    %v165 = vpop.f32.mrb[0].mxu0
    %166 = vmatprep.mubr.f32.mxu0 0.0
    %167 = vmatmul.mubr.f32.gmra.mrb[0].mxu0 %v73
    %v168 = vpop.f32.mrb[0].mxu0
    %v169 = vadd.f32 0.0, %v168
    %v170 = vpop.f32.mrb[0].mxu0
    %171 = vmatprep.mubr.f32.mxu0 0.0
    %172 = vmatmul.mubr.f32.gmra.mrb[0].mxu0 %v76
    %v173 = vpop.f32.mrb[0].mxu0
    %v174 = vadd.f32 0.0, %v173
    %v175 = vpop.f32.mrb[0].mxu0
    %176 = vmatprep.mubr.f32.mxu0 0.0
    %177 = vmatmul.mubr.f32.gmra.mrb[0].mxu0 %v79
    %v178 = vpop.f32.mrb[0].mxu0
    %v179 = vadd.f32 0.0, %v178
    %v180 = vpop.f32.mrb[0].mxu0
    %181 = vmatprep.mubr.f32.mxu0 0.0
    %182 = vmatmul.mubr.f32.gmra.mrb[0].mxu0 %v82
    %v183 = vpop.f32.mrb[0].mxu0
    %v184 = vadd.f32 0.0, %v183
    %v185 = vpop.f32.mrb[0].mxu0
    %186 = vmatprep.mubr.f32.mxu0 0.0
    %187 = vmatmul.mubr.f32.gmra.mrb[0].mxu0 %v85
    %v188 = vpop.f32.mrb[0].mxu0
    %v189 = vadd.f32 0.0, %v188
    %v190 = vpop.f32.mrb[0].mxu0
    %191 = vdwg.mxu0
    %v193 = vlaneseq
    %v194 = vshrl.u32 %v193, 7
    %v195 = vsub.s32 0, %v194
    %v196 = vrot.slane %v61, %v195
    %vm198 = vcmask 523264
    %v200 = vsel %vm198, %v43, 0
    %v203 = vsel %vm198, %v44, 0
    %v206 = vsel %vm198, %v45, 0
    %v209 = vsel %vm198, %v46, 0
    %v212 = vsel %vm198, %v47, 0
    %v215 = vsel %vm198, %v48, 0
    %v218 = vsel %vm198, %v49, 0
    %v221 = vsel %vm198, %v50, 0
    %223 = vmatprep.subr.mxu0 0.0
    %224 = vmatpush1.msra.mxu0 %v154
    %225 = vmatprep.subr.mxu0 0.0
    %226 = vmatpush1.msra.mxu0 %v159
    %227 = vmatprep.subr.mxu0 0.0
    %228 = vmatpush1.msra.mxu0 %v164
    %229 = vmatprep.subr.mxu0 0.0
    %230 = vmatpush1.msra.mxu0 %v169
    %231 = vmatprep.subr.mxu0 0.0
    %232 = vmatpush1.msra.mxu0 %v174
    %233 = vmatprep.subr.mxu0 0.0
    %234 = vmatpush1.msra.mxu0 %v179
    %235 = vmatprep.subr.mxu0 0.0
    %236 = vmatpush1.msra.mxu0 %v184
    %237 = vmatprep.subr.mxu0 0.0
    %238 = vmatpush1.msra.mxu0 %v189
    %239 = vmatprep.subr.mxu0 0.0
    %240 = vmatpush1.msra.mxu0 0.0
    %241 = vmatprep.subr.mxu0 0.0
    %242 = vmatpush1.msra.mxu0 0.0
    %243 = vmatprep.subr.mxu0 0.0
    %244 = vmatpush1.msra.mxu0 0.0
    %245 = vmatprep.subr.mxu0 0.0
    %246 = vmatpush1.msra.mxu0 0.0
    %247 = vmatprep.subr.mxu0 0.0
    %248 = vmatpush1.msra.mxu0 0.0
    %249 = vmatprep.subr.mxu0 0.0
    %250 = vmatpush1.msra.mxu0 0.0
    %251 = vmatprep.subr.mxu0 0.0
    %252 = vmatpush1.msra.mxu0 0.0
    %253 = vmatprep.subr.mxu0 0.0
    %254 = vmatpush1.msra.mxu0 0.0
    %255 = vmatprep.subr.mxu0 0.0
    %256 = vmatpush1.msra.mxu0 0.0
    %257 = vmatprep.subr.mxu0 0.0
    %258 = vmatpush1.msra.mxu0 0.0
    %259 = vmatprep.subr.mxu0 0.0
    %260 = vmatpush1.msra.mxu0 0.0
    %261 = vmatprep.subr.mxu0 0.0
    %262 = vmatpush1.msra.mxu0 0.0
    %263 = vmatprep.subr.mxu0 0.0
    %264 = vmatpush1.msra.mxu0 0.0
    %265 = vmatprep.subr.mxu0 0.0
    %266 = vmatpush1.msra.mxu0 0.0
    %267 = vmatprep.subr.mxu0 0.0
    %268 = vmatpush1.msra.mxu0 0.0
    %269 = vmatprep.subr.mxu0 0.0
    %270 = vmatpush1.msra.mxu0 0.0
    %271 = vmatprep.subr.mxu0 0.0
    %272 = vmatpush1.msra.mxu0 0.0
    %273 = vmatprep.subr.mxu0 0.0
    %274 = vmatpush1.msra.mxu0 0.0
    %275 = vmatprep.subr.mxu0 0.0
    %276 = vmatpush1.msra.mxu0 0.0
    %277 = vmatprep.subr.mxu0 0.0
    %278 = vmatpush1.msra.mxu0 0.0
    %279 = vmatprep.subr.mxu0 0.0
    %280 = vmatpush1.msra.mxu0 0.0
    %281 = vmatprep.subr.mxu0 0.0
    %282 = vmatpush1.msra.mxu0 0.0
    %283 = vmatprep.subr.mxu0 0.0
    %284 = vmatpush1.msra.mxu0 0.0
    %285 = vmatprep.subr.mxu0 0.0
    %286 = vmatpush1.msra.mxu0 0.0
    %287 = vmatprep.mubr.f32.mxu0 0.0
    %288 = vmatmul.mubr.f32.gmra.mrb[0].mxu0 %v200
    %v289 = vpop.f32.mrb[0].mxu0
    %v290 = vadd.f32 %v196, %v289
    %v291 = vpop.f32.mrb[0].mxu0
    %292 = vmatprep.mubr.f32.mxu0 0.0
    %293 = vmatmul.mubr.f32.gmra.mrb[0].mxu0 %v203
    %v294 = vpop.f32.mrb[0].mxu0
    %v295 = vadd.f32 %v196, %v294
    %v296 = vpop.f32.mrb[0].mxu0
    %297 = vmatprep.mubr.f32.mxu0 0.0
    %298 = vmatmul.mubr.f32.gmra.mrb[0].mxu0 %v206
    %v299 = vpop.f32.mrb[0].mxu0
    %v300 = vadd.f32 %v196, %v299
    %v301 = vpop.f32.mrb[0].mxu0
    %302 = vmatprep.mubr.f32.mxu0 0.0
    %303 = vmatmul.mubr.f32.gmra.mrb[0].mxu0 %v209
    %v304 = vpop.f32.mrb[0].mxu0
    %v305 = vadd.f32 %v196, %v304
    %v306 = vpop.f32.mrb[0].mxu0
    %307 = vmatprep.mubr.f32.mxu0 0.0
    %308 = vmatmul.mubr.f32.gmra.mrb[0].mxu0 %v212
    %v309 = vpop.f32.mrb[0].mxu0
    %v310 = vadd.f32 %v196, %v309
    %v311 = vpop.f32.mrb[0].mxu0
    %312 = vmatprep.mubr.f32.mxu0 0.0
    %313 = vmatmul.mubr.f32.gmra.mrb[0].mxu0 %v215
    %v314 = vpop.f32.mrb[0].mxu0
    %v315 = vadd.f32 %v196, %v314
    %v316 = vpop.f32.mrb[0].mxu0
    %317 = vmatprep.mubr.f32.mxu0 0.0
    %318 = vmatmul.mubr.f32.gmra.mrb[0].mxu0 %v218
    %v319 = vpop.f32.mrb[0].mxu0
    %v320 = vadd.f32 %v196, %v319
    %v321 = vpop.f32.mrb[0].mxu0
    %322 = vmatprep.mubr.f32.mxu0 0.0
    %323 = vmatmul.mubr.f32.gmra.mrb[0].mxu0 %v221
    %v324 = vpop.f32.mrb[0].mxu0
    %v325 = vadd.f32 %v196, %v324
    %v326 = vpop.f32.mrb[0].mxu0
    %327 = vdwg.mxu0
    %v328 = vmax.f32 %v290, 0.0
    %v329 = vmax.f32 %v295, 0.0
    %v330 = vmax.f32 %v300, 0.0
    %v331 = vmax.f32 %v305, 0.0
    %v332 = vmax.f32 %v310, 0.0
    %v333 = vmax.f32 %v315, 0.0
    %v334 = vmax.f32 %v320, 0.0
    %v335 = vmax.f32 %v325, 0.0
    %v336 = vld [vmem:[%s4] sm:$0xff]
    %v337 = vld [vmem:[%s4 + $0x8] sm:$0xff]
    %v338 = vld [vmem:[%s4 + $0x10] sm:$0xff]
    %v339 = vld [vmem:[%s4 + $0x18] sm:$0xff]
    %v340 = vld [vmem:[%s5] sm:$0x1]
    %vm341 = vcmask 261120
    %v343 = vsel %vm341, %v328, 0
    %v346 = vsel %vm341, %v329, 0
    %v349 = vsel %vm341, %v330, 0
    %v352 = vsel %vm341, %v331, 0
    %v355 = vsel %vm341, %v332, 0
    %v358 = vsel %vm341, %v333, 0
    %v361 = vsel %vm341, %v334, 0
    %v364 = vsel %vm341, %v335, 0
    %366 = vmatprep.subr.mxu0 0.0
    %367 = vmatpush1.msra.mxu0 %v336
    %368 = vmatprep.subr.mxu0 0.0
    %369 = vmatpush1.msra.mxu0 %v337
    %370 = vmatprep.subr.mxu0 0.0
    %371 = vmatpush1.msra.mxu0 %v338
    %372 = vmatprep.subr.mxu0 0.0
    %373 = vmatpush1.msra.mxu0 %v339
    %374 = vmatprep.subr.mxu0 0.0
    %375 = vmatpush1.msra.mxu0 0.0
    %376 = vmatprep.subr.mxu0 0.0
    %377 = vmatpush1.msra.mxu0 0.0
    %378 = vmatprep.subr.mxu0 0.0
    %379 = vmatpush1.msra.mxu0 0.0
    %380 = vmatprep.subr.mxu0 0.0
    %381 = vmatpush1.msra.mxu0 0.0
    %382 = vmatprep.subr.mxu0 0.0
    %383 = vmatpush1.msra.mxu0 0.0
    %384 = vmatprep.subr.mxu0 0.0
    %385 = vmatpush1.msra.mxu0 0.0
    %386 = vmatprep.subr.mxu0 0.0
    %387 = vmatpush1.msra.mxu0 0.0
    %388 = vmatprep.subr.mxu0 0.0
    %389 = vmatpush1.msra.mxu0 0.0
    %390 = vmatprep.subr.mxu0 0.0
    %391 = vmatpush1.msra.mxu0 0.0
    %392 = vmatprep.subr.mxu0 0.0
    %393 = vmatpush1.msra.mxu0 0.0
    %394 = vmatprep.subr.mxu0 0.0
    %395 = vmatpush1.msra.mxu0 0.0
    %396 = vmatprep.subr.mxu0 0.0
    %397 = vmatpush1.msra.mxu0 0.0
    %398 = vmatprep.subr.mxu0 0.0
    %399 = vmatpush1.msra.mxu0 0.0
    %400 = vmatprep.subr.mxu0 0.0
    %401 = vmatpush1.msra.mxu0 0.0
    %402 = vmatprep.subr.mxu0 0.0
    %403 = vmatpush1.msra.mxu0 0.0
    %404 = vmatprep.subr.mxu0 0.0
    %405 = vmatpush1.msra.mxu0 0.0
    %406 = vmatprep.subr.mxu0 0.0
    %407 = vmatpush1.msra.mxu0 0.0
    %408 = vmatprep.subr.mxu0 0.0
    %409 = vmatpush1.msra.mxu0 0.0
    %410 = vmatprep.subr.mxu0 0.0
    %411 = vmatpush1.msra.mxu0 0.0
    %412 = vmatprep.subr.mxu0 0.0
    %413 = vmatpush1.msra.mxu0 0.0
    %414 = vmatprep.subr.mxu0 0.0
    %415 = vmatpush1.msra.mxu0 0.0
    %416 = vmatprep.subr.mxu0 0.0
    %417 = vmatpush1.msra.mxu0 0.0
    %418 = vmatprep.subr.mxu0 0.0
    %419 = vmatpush1.msra.mxu0 0.0
    %420 = vmatprep.subr.mxu0 0.0
    %421 = vmatpush1.msra.mxu0 0.0
    %422 = vmatprep.subr.mxu0 0.0
    %423 = vmatpush1.msra.mxu0 0.0
    %424 = vmatprep.subr.mxu0 0.0
    %425 = vmatpush1.msra.mxu0 0.0
    %426 = vmatprep.subr.mxu0 0.0
    %427 = vmatpush1.msra.mxu0 0.0
    %428 = vmatprep.subr.mxu0 0.0
    %429 = vmatpush1.msra.mxu0 0.0
    %430 = vmatprep.mubr.f32.mxu0 0.0
    %431 = vmatmul.mubr.f32.gmra.mrb[0].mxu0 %v343
    %v432 = vpop.f32.mrb[0].mxu0
    %v433 = vadd.f32 0.0, %v432
    %v434 = vpop.f32.mrb[0].mxu0
    %435 = vmatprep.mubr.f32.mxu0 0.0
    %436 = vmatmul.mubr.f32.gmra.mrb[0].mxu0 %v346
    %v437 = vpop.f32.mrb[0].mxu0
    %v438 = vadd.f32 0.0, %v437
    %v439 = vpop.f32.mrb[0].mxu0
    %440 = vmatprep.mubr.f32.mxu0 0.0
    %441 = vmatmul.mubr.f32.gmra.mrb[0].mxu0 %v349
    %v442 = vpop.f32.mrb[0].mxu0
    %v443 = vadd.f32 0.0, %v442
    %v444 = vpop.f32.mrb[0].mxu0
    %445 = vmatprep.mubr.f32.mxu0 0.0
    %446 = vmatmul.mubr.f32.gmra.mrb[0].mxu0 %v352
    %v447 = vpop.f32.mrb[0].mxu0
    %v448 = vadd.f32 0.0, %v447
    %v449 = vpop.f32.mrb[0].mxu0
    %450 = vmatprep.mubr.f32.mxu0 0.0
    %451 = vmatmul.mubr.f32.gmra.mrb[0].mxu0 %v355
    %v452 = vpop.f32.mrb[0].mxu0
    %v453 = vadd.f32 0.0, %v452
    %v454 = vpop.f32.mrb[0].mxu0
    %455 = vmatprep.mubr.f32.mxu0 0.0
    %456 = vmatmul.mubr.f32.gmra.mrb[0].mxu0 %v358
    %v457 = vpop.f32.mrb[0].mxu0
    %v458 = vadd.f32 0.0, %v457
    %v459 = vpop.f32.mrb[0].mxu0
    %460 = vmatprep.mubr.f32.mxu0 0.0
    %461 = vmatmul.mubr.f32.gmra.mrb[0].mxu0 %v361
    %v462 = vpop.f32.mrb[0].mxu0
    %v463 = vadd.f32 0.0, %v462
    %v464 = vpop.f32.mrb[0].mxu0
    %465 = vmatprep.mubr.f32.mxu0 0.0
    %466 = vmatmul.mubr.f32.gmra.mrb[0].mxu0 %v364
    %v467 = vpop.f32.mrb[0].mxu0
    %v468 = vadd.f32 0.0, %v467
    %v469 = vpop.f32.mrb[0].mxu0
    %470 = vdwg.mxu0
    %v472 = vlaneseq
    %v473 = vshrl.u32 %v472, 7
    %v474 = vsub.s32 0, %v473
    %v475 = vrot.slane %v340, %v474
    %477 = vmatprep.subr.mxu0 0.0
    %478 = vmatpush1.msra.mxu0 %v433
    %479 = vmatprep.subr.mxu0 0.0
    %480 = vmatpush1.msra.mxu0 %v438
    %481 = vmatprep.subr.mxu0 0.0
    %482 = vmatpush1.msra.mxu0 %v443
    %483 = vmatprep.subr.mxu0 0.0
    %484 = vmatpush1.msra.mxu0 %v448
    %485 = vmatprep.subr.mxu0 0.0
    %486 = vmatpush1.msra.mxu0 %v453
    %487 = vmatprep.subr.mxu0 0.0
    %488 = vmatpush1.msra.mxu0 %v458
    %489 = vmatprep.subr.mxu0 0.0
    %490 = vmatpush1.msra.mxu0 %v463
    %491 = vmatprep.subr.mxu0 0.0
    %492 = vmatpush1.msra.mxu0 %v468
    %493 = vmatprep.subr.mxu0 0.0
    %494 = vmatpush1.msra.mxu0 0.0
    %495 = vmatprep.subr.mxu0 0.0
    %496 = vmatpush1.msra.mxu0 0.0
    %497 = vmatprep.subr.mxu0 0.0
    %498 = vmatpush1.msra.mxu0 0.0
    %499 = vmatprep.subr.mxu0 0.0
    %500 = vmatpush1.msra.mxu0 0.0
    %501 = vmatprep.subr.mxu0 0.0
    %502 = vmatpush1.msra.mxu0 0.0
    %503 = vmatprep.subr.mxu0 0.0
    %504 = vmatpush1.msra.mxu0 0.0
    %505 = vmatprep.subr.mxu0 0.0
    %506 = vmatpush1.msra.mxu0 0.0
    %507 = vmatprep.subr.mxu0 0.0
    %508 = vmatpush1.msra.mxu0 0.0
    %509 = vmatprep.subr.mxu0 0.0
    %510 = vmatpush1.msra.mxu0 0.0
    %511 = vmatprep.subr.mxu0 0.0
    %512 = vmatpush1.msra.mxu0 0.0
    %513 = vmatprep.subr.mxu0 0.0
    %514 = vmatpush1.msra.mxu0 0.0
    %515 = vmatprep.subr.mxu0 0.0
    %516 = vmatpush1.msra.mxu0 0.0
    %517 = vmatprep.subr.mxu0 0.0
    %518 = vmatpush1.msra.mxu0 0.0
    %519 = vmatprep.subr.mxu0 0.0
    %520 = vmatpush1.msra.mxu0 0.0
    %521 = vmatprep.subr.mxu0 0.0
    %522 = vmatpush1.msra.mxu0 0.0
    %523 = vmatprep.subr.mxu0 0.0
    %524 = vmatpush1.msra.mxu0 0.0
    %525 = vmatprep.subr.mxu0 0.0
    %526 = vmatpush1.msra.mxu0 0.0
    %527 = vmatprep.subr.mxu0 0.0
    %528 = vmatpush1.msra.mxu0 0.0
    %529 = vmatprep.subr.mxu0 0.0
    %530 = vmatpush1.msra.mxu0 0.0
    %531 = vmatprep.subr.mxu0 0.0
    %532 = vmatpush1.msra.mxu0 0.0
    %533 = vmatprep.subr.mxu0 0.0
    %534 = vmatpush1.msra.mxu0 0.0
    %535 = vmatprep.subr.mxu0 0.0
    %536 = vmatpush1.msra.mxu0 0.0
    %537 = vmatprep.subr.mxu0 0.0
    %538 = vmatpush1.msra.mxu0 0.0
    %539 = vmatprep.subr.mxu0 0.0
    %540 = vmatpush1.msra.mxu0 0.0
    %541 = vmatprep.mubr.f32.mxu0 0.0
    %542 = vmatmul.mubr.f32.gmra.mrb[0].mxu0 %v200
    %v543 = vpop.f32.mrb[0].mxu0
    %v544 = vadd.f32 %v475, %v543
    %v545 = vpop.f32.mrb[0].mxu0
    %546 = vmatprep.mubr.f32.mxu0 0.0
    %547 = vmatmul.mubr.f32.gmra.mrb[0].mxu0 %v203
    %v548 = vpop.f32.mrb[0].mxu0
    %v549 = vadd.f32 %v475, %v548
    %v550 = vpop.f32.mrb[0].mxu0
    %551 = vmatprep.mubr.f32.mxu0 0.0
    %552 = vmatmul.mubr.f32.gmra.mrb[0].mxu0 %v206
    %v553 = vpop.f32.mrb[0].mxu0
    %v554 = vadd.f32 %v475, %v553
    %v555 = vpop.f32.mrb[0].mxu0
    %556 = vmatprep.mubr.f32.mxu0 0.0
    %557 = vmatmul.mubr.f32.gmra.mrb[0].mxu0 %v209
    %v558 = vpop.f32.mrb[0].mxu0
    %v559 = vadd.f32 %v475, %v558
    %v560 = vpop.f32.mrb[0].mxu0
    %561 = vmatprep.mubr.f32.mxu0 0.0
    %562 = vmatmul.mubr.f32.gmra.mrb[0].mxu0 %v212
    %v563 = vpop.f32.mrb[0].mxu0
    %v564 = vadd.f32 %v475, %v563
    %v565 = vpop.f32.mrb[0].mxu0
    %566 = vmatprep.mubr.f32.mxu0 0.0
    %567 = vmatmul.mubr.f32.gmra.mrb[0].mxu0 %v215
    %v568 = vpop.f32.mrb[0].mxu0
    %v569 = vadd.f32 %v475, %v568
    %v570 = vpop.f32.mrb[0].mxu0
    %571 = vmatprep.mubr.f32.mxu0 0.0
    %572 = vmatmul.mubr.f32.gmra.mrb[0].mxu0 %v218
    %v573 = vpop.f32.mrb[0].mxu0
    %v574 = vadd.f32 %v475, %v573
    %v575 = vpop.f32.mrb[0].mxu0
    %576 = vmatprep.mubr.f32.mxu0 0.0
    %577 = vmatmul.mubr.f32.gmra.mrb[0].mxu0 %v221
    %v578 = vpop.f32.mrb[0].mxu0
    %v579 = vadd.f32 %v475, %v578
    %v580 = vpop.f32.mrb[0].mxu0
    %581 = vdwg.mxu0
    %v582 = vmax.f32 %v544, 0.0
    %v583 = vmax.f32 %v549, 0.0
    %v584 = vmax.f32 %v554, 0.0
    %v585 = vmax.f32 %v559, 0.0
    %v586 = vmax.f32 %v564, 0.0
    %v587 = vmax.f32 %v569, 0.0
    %v588 = vmax.f32 %v574, 0.0
    %v589 = vmax.f32 %v579, 0.0
    %v590 = vld [vmem:[%s6] sm:$0xff]
    %v591 = vld [vmem:[%s6 + $0x8] sm:$0xff]
    %v592 = vld [vmem:[%s6 + $0x10] sm:$0xff]
    %v593 = vld [vmem:[%s6 + $0x18] sm:$0xff]
    %v594 = vld [vmem:[%s7] sm:$0x1]
    %v596 = vsel %vm341, %v582, 0
    %v599 = vsel %vm341, %v583, 0
    %v602 = vsel %vm341, %v584, 0
    %v605 = vsel %vm341, %v585, 0
    %v608 = vsel %vm341, %v586, 0
    %v611 = vsel %vm341, %v587, 0
    %v614 = vsel %vm341, %v588, 0
    %v617 = vsel %vm341, %v589, 0
    %619 = vmatprep.subr.mxu0 0.0
    %620 = vmatpush1.msra.mxu0 %v590
    %621 = vmatprep.subr.mxu0 0.0
    %622 = vmatpush1.msra.mxu0 %v591
    %623 = vmatprep.subr.mxu0 0.0
    %624 = vmatpush1.msra.mxu0 %v592
    %625 = vmatprep.subr.mxu0 0.0
    %626 = vmatpush1.msra.mxu0 %v593
    %627 = vmatprep.subr.mxu0 0.0
    %628 = vmatpush1.msra.mxu0 0.0
    %629 = vmatprep.subr.mxu0 0.0
    %630 = vmatpush1.msra.mxu0 0.0
    %631 = vmatprep.subr.mxu0 0.0
    %632 = vmatpush1.msra.mxu0 0.0
    %633 = vmatprep.subr.mxu0 0.0
    %634 = vmatpush1.msra.mxu0 0.0
    %635 = vmatprep.subr.mxu0 0.0
    %636 = vmatpush1.msra.mxu0 0.0
    %637 = vmatprep.subr.mxu0 0.0
    %638 = vmatpush1.msra.mxu0 0.0
    %639 = vmatprep.subr.mxu0 0.0
    %640 = vmatpush1.msra.mxu0 0.0
    %641 = vmatprep.subr.mxu0 0.0
    %642 = vmatpush1.msra.mxu0 0.0
    %643 = vmatprep.subr.mxu0 0.0
    %644 = vmatpush1.msra.mxu0 0.0
    %645 = vmatprep.subr.mxu0 0.0
    %646 = vmatpush1.msra.mxu0 0.0
    %647 = vmatprep.subr.mxu0 0.0
    %648 = vmatpush1.msra.mxu0 0.0
    %649 = vmatprep.subr.mxu0 0.0
    %650 = vmatpush1.msra.mxu0 0.0
    %651 = vmatprep.subr.mxu0 0.0
    %652 = vmatpush1.msra.mxu0 0.0
    %653 = vmatprep.subr.mxu0 0.0
    %654 = vmatpush1.msra.mxu0 0.0
    %655 = vmatprep.subr.mxu0 0.0
    %656 = vmatpush1.msra.mxu0 0.0
    %657 = vmatprep.subr.mxu0 0.0
    %658 = vmatpush1.msra.mxu0 0.0
    %659 = vmatprep.subr.mxu0 0.0
    %660 = vmatpush1.msra.mxu0 0.0
    %661 = vmatprep.subr.mxu0 0.0
    %662 = vmatpush1.msra.mxu0 0.0
    %663 = vmatprep.subr.mxu0 0.0
    %664 = vmatpush1.msra.mxu0 0.0
    %665 = vmatprep.subr.mxu0 0.0
    %666 = vmatpush1.msra.mxu0 0.0
    %667 = vmatprep.subr.mxu0 0.0
    %668 = vmatpush1.msra.mxu0 0.0
    %669 = vmatprep.subr.mxu0 0.0
    %670 = vmatpush1.msra.mxu0 0.0
    %671 = vmatprep.subr.mxu0 0.0
    %672 = vmatpush1.msra.mxu0 0.0
    %673 = vmatprep.subr.mxu0 0.0
    %674 = vmatpush1.msra.mxu0 0.0
    %675 = vmatprep.subr.mxu0 0.0
    %676 = vmatpush1.msra.mxu0 0.0
    %677 = vmatprep.subr.mxu0 0.0
    %678 = vmatpush1.msra.mxu0 0.0
    %679 = vmatprep.subr.mxu0 0.0
    %680 = vmatpush1.msra.mxu0 0.0
    %681 = vmatprep.subr.mxu0 0.0
    %682 = vmatpush1.msra.mxu0 0.0
    %683 = vmatprep.mubr.f32.mxu0 0.0
    %684 = vmatmul.mubr.f32.gmra.mrb[0].mxu0 %v596
    %v685 = vpop.f32.mrb[0].mxu0
    %v686 = vadd.f32 0.0, %v685
    %v687 = vpop.f32.mrb[0].mxu0
    %688 = vmatprep.mubr.f32.mxu0 0.0
    %689 = vmatmul.mubr.f32.gmra.mrb[0].mxu0 %v599
    %v690 = vpop.f32.mrb[0].mxu0
    %v691 = vadd.f32 0.0, %v690
    %v692 = vpop.f32.mrb[0].mxu0
    %693 = vmatprep.mubr.f32.mxu0 0.0
    %694 = vmatmul.mubr.f32.gmra.mrb[0].mxu0 %v602
    %v695 = vpop.f32.mrb[0].mxu0
    %v696 = vadd.f32 0.0, %v695
    %v697 = vpop.f32.mrb[0].mxu0
    %698 = vmatprep.mubr.f32.mxu0 0.0
    %699 = vmatmul.mubr.f32.gmra.mrb[0].mxu0 %v605
    %v700 = vpop.f32.mrb[0].mxu0
    %v701 = vadd.f32 0.0, %v700
    %v702 = vpop.f32.mrb[0].mxu0
    %703 = vmatprep.mubr.f32.mxu0 0.0
    %704 = vmatmul.mubr.f32.gmra.mrb[0].mxu0 %v608
    %v705 = vpop.f32.mrb[0].mxu0
    %v706 = vadd.f32 0.0, %v705
    %v707 = vpop.f32.mrb[0].mxu0
    %708 = vmatprep.mubr.f32.mxu0 0.0
    %709 = vmatmul.mubr.f32.gmra.mrb[0].mxu0 %v611
    %v710 = vpop.f32.mrb[0].mxu0
    %v711 = vadd.f32 0.0, %v710
    %v712 = vpop.f32.mrb[0].mxu0
    %713 = vmatprep.mubr.f32.mxu0 0.0
    %714 = vmatmul.mubr.f32.gmra.mrb[0].mxu0 %v614
    %v715 = vpop.f32.mrb[0].mxu0
    %v716 = vadd.f32 0.0, %v715
    %v717 = vpop.f32.mrb[0].mxu0
    %718 = vmatprep.mubr.f32.mxu0 0.0
    %719 = vmatmul.mubr.f32.gmra.mrb[0].mxu0 %v617
    %v720 = vpop.f32.mrb[0].mxu0
    %v721 = vadd.f32 0.0, %v720
    %v722 = vpop.f32.mrb[0].mxu0
    %723 = vdwg.mxu0
    %v725 = vlaneseq
    %v726 = vshrl.u32 %v725, 7
    %v727 = vsub.s32 0, %v726
    %v728 = vrot.slane %v594, %v727
    %730 = vmatprep.subr.mxu0 0.0
    %731 = vmatpush1.msra.mxu0 %v686
    %732 = vmatprep.subr.mxu0 0.0
    %733 = vmatpush1.msra.mxu0 %v691
    %734 = vmatprep.subr.mxu0 0.0
    %735 = vmatpush1.msra.mxu0 %v696
    %736 = vmatprep.subr.mxu0 0.0
    %737 = vmatpush1.msra.mxu0 %v701
    %738 = vmatprep.subr.mxu0 0.0
    %739 = vmatpush1.msra.mxu0 %v706
    %740 = vmatprep.subr.mxu0 0.0
    %741 = vmatpush1.msra.mxu0 %v711
    %742 = vmatprep.subr.mxu0 0.0
    %743 = vmatpush1.msra.mxu0 %v716
    %744 = vmatprep.subr.mxu0 0.0
    %745 = vmatpush1.msra.mxu0 %v721
    %746 = vmatprep.subr.mxu0 0.0
    %747 = vmatpush1.msra.mxu0 0.0
    %748 = vmatprep.subr.mxu0 0.0
    %749 = vmatpush1.msra.mxu0 0.0
    %750 = vmatprep.subr.mxu0 0.0
    %751 = vmatpush1.msra.mxu0 0.0
    %752 = vmatprep.subr.mxu0 0.0
    %753 = vmatpush1.msra.mxu0 0.0
    %754 = vmatprep.subr.mxu0 0.0
    %755 = vmatpush1.msra.mxu0 0.0
    %756 = vmatprep.subr.mxu0 0.0
    %757 = vmatpush1.msra.mxu0 0.0
    %758 = vmatprep.subr.mxu0 0.0
    %759 = vmatpush1.msra.mxu0 0.0
    %760 = vmatprep.subr.mxu0 0.0
    %761 = vmatpush1.msra.mxu0 0.0
    %762 = vmatprep.subr.mxu0 0.0
    %763 = vmatpush1.msra.mxu0 0.0
    %764 = vmatprep.subr.mxu0 0.0
    %765 = vmatpush1.msra.mxu0 0.0
    %766 = vmatprep.subr.mxu0 0.0
    %767 = vmatpush1.msra.mxu0 0.0
    %768 = vmatprep.subr.mxu0 0.0
    %769 = vmatpush1.msra.mxu0 0.0
    %770 = vmatprep.subr.mxu0 0.0
    %771 = vmatpush1.msra.mxu0 0.0
    %772 = vmatprep.subr.mxu0 0.0
    %773 = vmatpush1.msra.mxu0 0.0
    %774 = vmatprep.subr.mxu0 0.0
    %775 = vmatpush1.msra.mxu0 0.0
    %776 = vmatprep.subr.mxu0 0.0
    %777 = vmatpush1.msra.mxu0 0.0
    %778 = vmatprep.subr.mxu0 0.0
    %779 = vmatpush1.msra.mxu0 0.0
    %780 = vmatprep.subr.mxu0 0.0
    %781 = vmatpush1.msra.mxu0 0.0
    %782 = vmatprep.subr.mxu0 0.0
    %783 = vmatpush1.msra.mxu0 0.0
    %784 = vmatprep.subr.mxu0 0.0
    %785 = vmatpush1.msra.mxu0 0.0
    %786 = vmatprep.subr.mxu0 0.0
    %787 = vmatpush1.msra.mxu0 0.0
    %788 = vmatprep.subr.mxu0 0.0
    %789 = vmatpush1.msra.mxu0 0.0
    %790 = vmatprep.subr.mxu0 0.0
    %791 = vmatpush1.msra.mxu0 0.0
    %792 = vmatprep.subr.mxu0 0.0
    %793 = vmatpush1.msra.mxu0 0.0
    %794 = vmatprep.mubr.f32.mxu0 0.0
    %795 = vmatmul.mubr.f32.gmra.mrb[0].mxu0 %v200
    %v796 = vpop.f32.mrb[0].mxu0
    %v797 = vadd.f32 %v728, %v796
    %v798 = vpop.f32.mrb[0].mxu0
    %799 = vmatprep.mubr.f32.mxu0 0.0
    %800 = vmatmul.mubr.f32.gmra.mrb[0].mxu0 %v203
    %v801 = vpop.f32.mrb[0].mxu0
    %v802 = vadd.f32 %v728, %v801
    %v803 = vpop.f32.mrb[0].mxu0
    %804 = vmatprep.mubr.f32.mxu0 0.0
    %805 = vmatmul.mubr.f32.gmra.mrb[0].mxu0 %v206
    %v806 = vpop.f32.mrb[0].mxu0
    %v807 = vadd.f32 %v728, %v806
    %v808 = vpop.f32.mrb[0].mxu0
    %809 = vmatprep.mubr.f32.mxu0 0.0
    %810 = vmatmul.mubr.f32.gmra.mrb[0].mxu0 %v209
    %v811 = vpop.f32.mrb[0].mxu0
    %v812 = vadd.f32 %v728, %v811
    %v813 = vpop.f32.mrb[0].mxu0
    %814 = vmatprep.mubr.f32.mxu0 0.0
    %815 = vmatmul.mubr.f32.gmra.mrb[0].mxu0 %v212
    %v816 = vpop.f32.mrb[0].mxu0
    %v817 = vadd.f32 %v728, %v816
    %v818 = vpop.f32.mrb[0].mxu0
    %819 = vmatprep.mubr.f32.mxu0 0.0
    %820 = vmatmul.mubr.f32.gmra.mrb[0].mxu0 %v215
    %v821 = vpop.f32.mrb[0].mxu0
    %v822 = vadd.f32 %v728, %v821
    %v823 = vpop.f32.mrb[0].mxu0
    %824 = vmatprep.mubr.f32.mxu0 0.0
    %825 = vmatmul.mubr.f32.gmra.mrb[0].mxu0 %v218
    %v826 = vpop.f32.mrb[0].mxu0
    %v827 = vadd.f32 %v728, %v826
    %v828 = vpop.f32.mrb[0].mxu0
    %829 = vmatprep.mubr.f32.mxu0 0.0
    %830 = vmatmul.mubr.f32.gmra.mrb[0].mxu0 %v221
    %v831 = vpop.f32.mrb[0].mxu0
    %v832 = vadd.f32 %v728, %v831
    %v833 = vpop.f32.mrb[0].mxu0
    %834 = vdwg.mxu0
    %v835 = vtanh.pop %v797
    %v836 = vtanh.pop %v802
    %v837 = vtanh.pop %v807
    %v838 = vtanh.pop %v812
    %v839 = vtanh.pop %v817
    %v840 = vtanh.pop %v822
    %v841 = vtanh.pop %v827
    %v842 = vtanh.pop %v832
    %vm843 = vcmask 64512
    %844 = vst.msk [vmem:[%s8] sm:$0xff] %vm843, %v835
    %845 = vst.msk [vmem:[%s8 + $0x8] sm:$0xff] %vm843, %v836
    %846 = vst.msk [vmem:[%s8 + $0x10] sm:$0xff] %vm843, %v837
    %847 = vst.msk [vmem:[%s8 + $0x18] sm:$0xff] %vm843, %v838
    %848 = vst.msk [vmem:[%s8 + $0x20] sm:$0xff] %vm843, %v839
    %849 = vst.msk [vmem:[%s8 + $0x28] sm:$0xff] %vm843, %v840
    %850 = vst.msk [vmem:[%s8 + $0x30] sm:$0xff] %vm843, %v841
    %851 = vst.msk [vmem:[%s8 + $0x38] sm:$0xff] %vm843, %v842
    // Predicated region
    $region38: #{tpu_custom_call.1} parent=1 // pred_check
      _
    $region39: #{tpu_custom_call.1} parent=1 // pred_check_branch
      %853 = sbr.rel (0) target = $region41
    $region40: #{tpu_custom_call.1} parent=1 // pred_region
      _
    $region41: #{tpu_custom_call.1} parent=1 // pred_fallthru
      _
    // Predicated region
    $region42: #{tpu_custom_call.1} parent=1 // pred_check
      _
    $region43: #{tpu_custom_call.1} parent=1 // pred_check_branch
      %855 = sbr.rel (0) target = $region45
    $region44: #{tpu_custom_call.1} parent=1 // pred_region
      _
    $region45: #{tpu_custom_call.1} parent=1 // pred_fallthru
      _
    %856 = vsyncpa [#allocation3], 1

</llo_original>
